<compile_context>
chip_gen: v5e
topology: v5e:2x2
jax: 0.10.0
libtpu: 0.0.40
codegen_flags: <defaults>
</compile_context>

<pallas_src>
import re
from functools import partial

import jax
import jax.numpy as jnp
from jax import lax
from jax.experimental import pallas as pl
from jax.experimental.pallas import tpu as pltpu

_MiB = 1024 * 1024


def attention_kernel(x_ref, wqkvT_ref, woutT_ref, oT_ref, qkv_ref, att_ref,
                     *, num_heads, head_dim):
    H, hd = num_heads, head_dim
    D = H * hd
    scale = 1.0 / (hd ** 0.5)

    # QKV projection on the MXU: (3D, D) x (tb, D)^T -> (3D, tb), f32 accumulate.
    # trans-B contraction (both D axes are the minor/lane axes) is the native
    # q@k^T MXU pattern, so the (tb, D) x tile needs no relayout.
    qkv_ref[...] = lax.dot_general(
        wqkvT_ref[...], x_ref[...],
        dimension_numbers=(((1,), (1,)), ((), ())),
        preferred_element_type=jnp.float32,
    ).astype(qkv_ref.dtype)

    # Per-token attention over the *head* axis (faithful to the PyTorch module).
    # Tokens sit on lanes: every multiply below is full 128-lane VPU work, the
    # hd contraction is a cheap sublane reduce, and each score row is a
    # lane-dense (1, tb) vector.  Online softmax over g keeps only the running
    # (m, denom) pair and one (hd, tb) accumulator live per head.
    def score(q, g):
        k_g = qkv_ref[D + g * hd:D + (g + 1) * hd, :]
        return jnp.sum((q * k_g).astype(jnp.float32), axis=0,
                       keepdims=True) * scale                      # (1, tb) f32

    for h in range(H):                                             # static unroll (H small)
        q = qkv_ref[h * hd:(h + 1) * hd, :]                        # (hd, tb)
        m = score(q, 0)
        denom = jnp.ones_like(m)
        acc = qkv_ref[2 * D:2 * D + hd, :].astype(jnp.float32)     # exp(s0-m)=1 -> acc=v0
        for g in range(1, H):
            s = score(q, g)
            m_new = jnp.maximum(m, s)
            corr = jnp.exp(m - m_new)
            p = jnp.exp(s - m_new)
            denom = denom * corr + p
            v_g = qkv_ref[2 * D + g * hd:2 * D + (g + 1) * hd, :]
            acc = acc * corr + p * v_g
            m = m_new
        inv = pl.reciprocal(denom, approx=True)                    # EUP slot (~free)
        inv = inv * (2.0 - denom * inv)                            # 1 Newton step -> f32-exact
        att_ref[h * hd:(h + 1) * hd, :] = (acc * inv).astype(att_ref.dtype)

    # Output projection: (D, D) x (D, tb) -> (D, tb), f32 accumulate.
    oT_ref[...] = jnp.dot(woutT_ref[...], att_ref[...],
                          preferred_element_type=jnp.float32).astype(oT_ref.dtype)


def _cdiv(a, b):
    return -(-a // b)


def _round_up(a, b):
    return _cdiv(a, b) * b


def _tpu_generation():
    """Best-effort TPU generation (4/5/6/7/...); 0 if unknown."""
    try:
        kind = jax.devices()[0].device_kind.lower()
    except Exception:
        return 0
    m = re.search(r"v(\d+)", kind)
    return int(m.group(1)) if m else 0


def _vmem_capacity_bytes(gen):
    try:
        info = pltpu.get_tpu_info()
        for name in ("vmem_capacity_bytes", "vmem_bytes", "vmem_size_bytes"):
            v = getattr(info, name, None)
            if v:
                return int(v)
    except Exception:
        pass
    if gen in (5, 6):
        return 128 * _MiB
    return 64 * _MiB                      # v7x, and conservative for unknown chips


def _vmem_ceiling_bytes(gen):
    cap = _vmem_capacity_bytes(gen)
    # ~56 of v7x's 64 MiB, ~108 of v5e/v6e's 128 MiB (leave compiler slack).
    target = 108 * _MiB if gen in (5, 6) else 56 * _MiB
    return int(max(32 * _MiB, min(target, cap - 8 * _MiB)))


def _plan_tiles(M, D, x_bytes, w_bytes, qkv_bytes, att_bytes, gen, ceiling,
                requested):
    """Pick a padding-minimizing token tile (multiple of 128) that fits VMEM."""
    def footprint(tb):
        return (2 * tb * D * x_bytes          # x tile (double-buffered)
                + 2 * D * tb * x_bytes        # out tile (double-buffered)
                + 4 * D * D * w_bytes         # resident weights (single buffer)
                + 3 * D * tb * qkv_bytes      # qkv^T scratch
                + D * tb * att_bytes)         # attention-output^T scratch

    if M <= 128:
        return M, 1, M                        # full-extent block, zero padding
    cap = 1024 if requested is None else max(128, (min(int(requested), 4096) // 128) * 128)
    tb_max = 128
    t = 256
    while t <= cap and footprint(t) <= ceiling:
        tb_max = t
        t += 128
    # TODO(synk): if footprint(128) still exceeds the ceiling (huge D on v7x),
    # K-tile the projections / stream weights from HBM instead.
    nb = _cdiv(M, tb_max)
    if gen >= 7 and nb < 2:
        nb = 2                                # only v7x has 2 TensorCores to feed
    tb = _round_up(_cdiv(M, nb), 128)         # minimize zero-padded tokens
    nb = _cdiv(M, tb)
    return tb, nb, nb * tb


def _weight_spec(block_shape, buffers, nbytes):
    # Constant index_map => the second pipeline buffer would never be used but
    # still reserves VMEM; single-buffer large resident weights.  Small weights
    # keep the default spec (footprint irrelevant, proven path).
    if buffers is not None and nbytes >= 2 * _MiB and hasattr(pl, "Buffered"):
        try:
            return pl.BlockSpec(block_shape, lambda i: (0, 0),
                                pipeline_mode=pl.Buffered(int(buffers)))
        except TypeError:                     # older jax without pipeline_mode
            pass
    return pl.BlockSpec(block_shape, lambda i: (0, 0))


def simple_standard_attention(x, w_qkv, w_out, num_heads, *,
                              token_block=None, weight_buffers=1):
    """x: (B, T, D), w_qkv: (D, 3D), w_out: (D, D)  ->  (B, T, D).

    Weights use the (in, out) convention; nn.Linear stores (out, in) — i.e.
    these transposed.  Both projections are bias-free, matching the module.
    For best MXU utilization D should be a multiple of 256 (v6e/v7x) / 128
    (v5e); head_dim a multiple of 8 keeps the per-head slices sublane-aligned.
    """
    B, T, D = x.shape
    assert D % num_heads == 0, "model_dim must be divisible by num_heads"
    head_dim = D // num_heads
    M = B * T

    gen = _tpu_generation()
    ceiling = _vmem_ceiling_bytes(gen)

    x_dt = jnp.dtype(x.dtype)
    w_dt = jnp.dtype(w_qkv.dtype)
    # bf16 elementwise attention math only where the VPU has bf16 (v6e/v7x);
    # on v5e (or for f32 inputs) keep the qkv intermediate in f32.
    qkv_dtype = (jnp.dtype(jnp.bfloat16)
                 if (x_dt == jnp.dtype(jnp.bfloat16) and gen >= 6)
                 else jnp.dtype(jnp.float32))
    att_dtype = jnp.dtype(w_out.dtype)        # match weight dtype for the MXU fast path

    tb, num_blocks, M_pad = _plan_tiles(
        M, D, x_dt.itemsize, w_dt.itemsize, qkv_dtype.itemsize,
        att_dtype.itemsize, gen, ceiling, token_block)

    x2 = x.reshape(M, D)
    if M_pad != M:
        # Zero padding tokens => v == 0 => their outputs are exactly 0 and get
        # sliced off below (their softmax is uniform but harmless).
        x2 = jnp.pad(x2, ((0, M_pad - M), (0, 0)))
    wqkvT = jnp.swapaxes(w_qkv, 0, 1)          # (3D, D) == nn.Linear native (out, in)
    woutT = jnp.swapaxes(w_out, 0, 1)          # (D, D)

    kernel = partial(attention_kernel, num_heads=num_heads, head_dim=head_dim)

    cost = pl.CostEstimate(
        flops=int(2 * M_pad * D * 3 * D                         # QKV projection
                  + 2 * M_pad * D * D                           # output projection
                  + 4 * M_pad * num_heads * num_heads * head_dim),
        transcendentals=int(2 * M_pad * num_heads * num_heads),
        bytes_accessed=int(x2.size * x_dt.itemsize
                           + (wqkvT.size + woutT.size) * w_dt.itemsize
                           + D * M_pad * x_dt.itemsize),
    )

    oT = pl.pallas_call(
        kernel,
        out_shape=jax.ShapeDtypeStruct((D, M_pad), x.dtype),
        grid_spec=pltpu.PrefetchScalarGridSpec(
            num_scalar_prefetch=0,
            grid=(num_blocks,),
            in_specs=[
                pl.BlockSpec((tb, D), lambda i: (i, 0)),        # token tile of x
                _weight_spec((3 * D, D), weight_buffers,
                             wqkvT.size * w_dt.itemsize),       # W_qkv^T (resident)
                _weight_spec((D, D), weight_buffers,
                             woutT.size * w_dt.itemsize),       # W_out^T (resident)
            ],
            out_specs=pl.BlockSpec((D, tb), lambda i: (0, i)),  # lane-dense store
            scratch_shapes=[
                pltpu.VMEM((3 * D, tb), qkv_dtype),             # qkv^T intermediate
                pltpu.VMEM((D, tb), att_dtype),                 # attention output^T
            ],
        ),
        compiler_params=pltpu.CompilerParams(
            dimension_semantics=("parallel",),
            vmem_limit_bytes=int(ceiling),
        ),
        cost_estimate=cost,
    )(x2, wqkvT, woutT)

    # Single wrapper-side transpose (output only); the input-side transpose of
    # the previous revision was removed via the trans-B QKV matmul.
    return jnp.swapaxes(oT[:, :M], 0, 1).reshape(B, T, D)


def reference(x, w_qkv, w_out, num_heads):
    """Pure-JAX transcription of the PyTorch forward (for validation)."""
    B, T, D = x.shape
    hd = D // num_heads
    qkv = (x @ w_qkv).reshape(B, T, 3, num_heads, hd)
    q, k, v = qkv[:, :, 0], qkv[:, :, 1], qkv[:, :, 2]          # (B, T, H, hd)
    scores = jnp.einsum("bthd,btgd->bthg", q, k) / hd ** 0.5
    attn = jax.nn.softmax(scores, axis=-1)
    out = jnp.einsum("bthg,btgd->bthd", attn, v).reshape(B, T, D)
    return out @ w_out


if __name__ == "__main__":
    B, T, D, H = 2, 8, 32, 4

    key = jax.random.PRNGKey(0)
    kx, kq, ko = jax.random.split(key, 3)
    x = jax.random.normal(kx, (B, T, D), dtype=jnp.float32)
    # nn.Linear stores (out, in); we keep the mathematically equivalent (in, out)
    # here and the wrapper transposes to the kernel's W^T layout.
    w_qkv = jax.random.normal(kq, (D, 3 * D), dtype=jnp.float32) * (1.0 / D ** 0.5)
    w_out = jax.random.normal(ko, (D, D), dtype=jnp.float32) * (1.0 / D ** 0.5)

    out = simple_standard_attention(x, w_qkv, w_out, H)
    out = jax.block_until_ready(out)

    ref = reference(x, w_qkv, w_out, H)
    assert out.shape == (B, T, D)
    err = float(jnp.max(jnp.abs(out - ref)))
    # Tight tolerance again: the approx reciprocal is refined with one Newton
    # step, so the whole pipeline is f32-exact at these shapes.
    assert jnp.allclose(out, ref, atol=1e-3, rtol=1e-3), \
        f"mismatch vs reference (max |diff| = {err})"

    print("KERNEL_OK")
</pallas_src>

<mosaic_0001>
module attributes {stable_mosaic.version = 11 : i64} {
  func.func @attention_kernel(%arg0: i32, %arg1: memref<16x32xf32, #tpu.memory_space<vmem>>, %arg2: memref<96x32xf32, #tpu.memory_space<vmem>>, %arg3: memref<32x32xf32, #tpu.memory_space<vmem>>, %arg4: memref<32x16xf32, #tpu.memory_space<vmem>>, %arg5: memref<96x16xf32, #tpu.memory_space<vmem>>, %arg6: memref<32x16xf32, #tpu.memory_space<vmem>>) attributes {dimension_semantics = [#tpu.dimension_semantics<parallel>], iteration_bounds = array<i64: 1>, scalar_prefetch = 0 : i64, scratch_operands = 2 : i64, tpu.core_type = #tpu.core_type<tc>, window_params = [{transform_indices = @transform_0, window_bounds = array<i64: 16, 32>}, {pipeline_mode = #tpu.pipeline_mode<synchronous>, transform_indices = @transform_1, window_bounds = array<i64: 96, 32>}, {pipeline_mode = #tpu.pipeline_mode<synchronous>, transform_indices = @transform_2, window_bounds = array<i64: 32, 32>}, {transform_indices = @transform_3, window_bounds = array<i64: 32, 16>}]} {
    %c0 = arith.constant 0 : index
    %c0_0 = arith.constant 0 : index
    %0 = vector.load %arg2[%c0, %c0_0] : memref<96x32xf32, #tpu.memory_space<vmem>>, vector<96x32xf32>
    %c0_1 = arith.constant 0 : index
    %c0_2 = arith.constant 0 : index
    %1 = vector.load %arg1[%c0_1, %c0_2] : memref<16x32xf32, #tpu.memory_space<vmem>>, vector<16x32xf32>
    %cst = arith.constant dense<0.000000e+00> : vector<96x16xf32>
    %2 = tpu.matmul %0, %1, %cst {dimension_numbers = #tpu.dot_dimension_numbers<[1], [1], [0], [0], [0, 0, 1, 0], [], []>} : vector<96x32xf32>, vector<16x32xf32>, vector<96x16xf32> -> vector<96x16xf32>
    %c0_3 = arith.constant 0 : index
    %c0_4 = arith.constant 0 : index
    %3 = vector.load %arg5[%c0_3, %c0_4] : memref<96x16xf32, #tpu.memory_space<vmem>>, vector<96x16xf32>
    tpu.vector_store %arg5[%c0_3, %c0_4], %2 {strides = array<i32>} : memref<96x16xf32, #tpu.memory_space<vmem>>, vector<96x16xf32>,
    %c0_5 = arith.constant 0 : index
    %c0_6 = arith.constant 0 : index
    %4 = vector.load %arg5[%c0_5, %c0_6] : memref<96x16xf32, #tpu.memory_space<vmem>>, vector<8x16xf32>
    %c32 = arith.constant 32 : index
    %c0_7 = arith.constant 0 : index
    %5 = vector.load %arg5[%c32, %c0_7] : memref<96x16xf32, #tpu.memory_space<vmem>>, vector<8x16xf32>
    %6 = arith.mulf %4, %5 : vector<8x16xf32>
    %cst_8 = arith.constant dense<0.000000e+00> : vector<16xf32>
    %7 = vector.multi_reduction <add>, %6, %cst_8 [0] : vector<8x16xf32> to vector<16xf32>
    %8 = vector.shape_cast %7 : vector<16xf32> to vector<1x16xf32>
    %cst_9 = arith.constant 0.353553385 : f32
    %9 = vector.broadcast %cst_9 : f32 to vector<1x16xf32>
    %10 = arith.mulf %8, %9 : vector<1x16xf32>
    %cst_10 = arith.constant 1.000000e+00 : f32
    %11 = vector.broadcast %cst_10 : f32 to vector<1x16xf32>
    %c64 = arith.constant 64 : index
    %c0_11 = arith.constant 0 : index
    %12 = vector.load %arg5[%c64, %c0_11] : memref<96x16xf32, #tpu.memory_space<vmem>>, vector<8x16xf32>
    %c40 = arith.constant 40 : index
    %c0_12 = arith.constant 0 : index
    %13 = vector.load %arg5[%c40, %c0_12] : memref<96x16xf32, #tpu.memory_space<vmem>>, vector<8x16xf32>
    %14 = arith.mulf %4, %13 : vector<8x16xf32>
    %cst_13 = arith.constant dense<0.000000e+00> : vector<16xf32>
    %15 = vector.multi_reduction <add>, %14, %cst_13 [0] : vector<8x16xf32> to vector<16xf32>
    %16 = vector.shape_cast %15 : vector<16xf32> to vector<1x16xf32>
    %cst_14 = arith.constant 0.353553385 : f32
    %17 = vector.broadcast %cst_14 : f32 to vector<1x16xf32>
    %18 = arith.mulf %16, %17 : vector<1x16xf32>
    %19 = arith.maximumf %10, %18 : vector<1x16xf32>
    %20 = arith.subf %10, %19 : vector<1x16xf32>
    %21 = math.exp %20 : vector<1x16xf32>
    %22 = arith.subf %18, %19 : vector<1x16xf32>
    %23 = math.exp %22 : vector<1x16xf32>
    %24 = arith.mulf %11, %21 : vector<1x16xf32>
    %25 = arith.addf %24, %23 : vector<1x16xf32>
    %c72 = arith.constant 72 : index
    %c0_15 = arith.constant 0 : index
    %26 = vector.load %arg5[%c72, %c0_15] : memref<96x16xf32, #tpu.memory_space<vmem>>, vector<8x16xf32>
    %27 = vector.broadcast %21 : vector<1x16xf32> to vector<8x16xf32>
    %28 = arith.mulf %12, %27 : vector<8x16xf32>
    %29 = vector.broadcast %23 : vector<1x16xf32> to vector<8x16xf32>
    %30 = arith.mulf %29, %26 : vector<8x16xf32>
    %31 = arith.addf %28, %30 : vector<8x16xf32>
    %c48 = arith.constant 48 : index
    %c0_16 = arith.constant 0 : index
    %32 = vector.load %arg5[%c48, %c0_16] : memref<96x16xf32, #tpu.memory_space<vmem>>, vector<8x16xf32>
    %33 = arith.mulf %4, %32 : vector<8x16xf32>
    %cst_17 = arith.constant dense<0.000000e+00> : vector<16xf32>
    %34 = vector.multi_reduction <add>, %33, %cst_17 [0] : vector<8x16xf32> to vector<16xf32>
    %35 = vector.shape_cast %34 : vector<16xf32> to vector<1x16xf32>
    %cst_18 = arith.constant 0.353553385 : f32
    %36 = vector.broadcast %cst_18 : f32 to vector<1x16xf32>
    %37 = arith.mulf %35, %36 : vector<1x16xf32>
    %38 = arith.maximumf %19, %37 : vector<1x16xf32>
    %39 = arith.subf %19, %38 : vector<1x16xf32>
    %40 = math.exp %39 : vector<1x16xf32>
    %41 = arith.subf %37, %38 : vector<1x16xf32>
    %42 = math.exp %41 : vector<1x16xf32>
    %43 = arith.mulf %25, %40 : vector<1x16xf32>
    %44 = arith.addf %43, %42 : vector<1x16xf32>
    %c80 = arith.constant 80 : index
    %c0_19 = arith.constant 0 : index
    %45 = vector.load %arg5[%c80, %c0_19] : memref<96x16xf32, #tpu.memory_space<vmem>>, vector<8x16xf32>
    %46 = vector.broadcast %40 : vector<1x16xf32> to vector<8x16xf32>
    %47 = arith.mulf %31, %46 : vector<8x16xf32>
    %48 = vector.broadcast %42 : vector<1x16xf32> to vector<8x16xf32>
    %49 = arith.mulf %48, %45 : vector<8x16xf32>
    %50 = arith.addf %47, %49 : vector<8x16xf32>
    %c56 = arith.constant 56 : index
    %c0_20 = arith.constant 0 : index
    %51 = vector.load %arg5[%c56, %c0_20] : memref<96x16xf32, #tpu.memory_space<vmem>>, vector<8x16xf32>
    %52 = arith.mulf %4, %51 : vector<8x16xf32>
    %cst_21 = arith.constant dense<0.000000e+00> : vector<16xf32>
    %53 = vector.multi_reduction <add>, %52, %cst_21 [0] : vector<8x16xf32> to vector<16xf32>
    %54 = vector.shape_cast %53 : vector<16xf32> to vector<1x16xf32>
    %cst_22 = arith.constant 0.353553385 : f32
    %55 = vector.broadcast %cst_22 : f32 to vector<1x16xf32>
    %56 = arith.mulf %54, %55 : vector<1x16xf32>
    %57 = arith.maximumf %38, %56 : vector<1x16xf32>
    %58 = arith.subf %38, %57 : vector<1x16xf32>
    %59 = math.exp %58 : vector<1x16xf32>
    %60 = arith.subf %56, %57 : vector<1x16xf32>
    %61 = math.exp %60 : vector<1x16xf32>
    %62 = arith.mulf %44, %59 : vector<1x16xf32>
    %63 = arith.addf %62, %61 : vector<1x16xf32>
    %c88 = arith.constant 88 : index
    %c0_23 = arith.constant 0 : index
    %64 = vector.load %arg5[%c88, %c0_23] : memref<96x16xf32, #tpu.memory_space<vmem>>, vector<8x16xf32>
    %65 = vector.broadcast %59 : vector<1x16xf32> to vector<8x16xf32>
    %66 = arith.mulf %50, %65 : vector<8x16xf32>
    %67 = vector.broadcast %61 : vector<1x16xf32> to vector<8x16xf32>
    %68 = arith.mulf %67, %64 : vector<8x16xf32>
    %69 = arith.addf %66, %68 : vector<8x16xf32>
    %70 = tpu.reciprocal %63 {approx = true} : vector<1x16xf32> -> vector<1x16xf32>
    %71 = arith.mulf %63, %70 : vector<1x16xf32>
    %cst_24 = arith.constant 2.000000e+00 : f32
    %72 = vector.broadcast %cst_24 : f32 to vector<1x16xf32>
    %73 = arith.subf %72, %71 : vector<1x16xf32>
    %74 = arith.mulf %70, %73 : vector<1x16xf32>
    %75 = vector.broadcast %74 : vector<1x16xf32> to vector<8x16xf32>
    %76 = arith.mulf %69, %75 : vector<8x16xf32>
    %c0_25 = arith.constant 0 : index
    %c0_26 = arith.constant 0 : index
    %77 = vector.load %arg6[%c0_25, %c0_26] : memref<32x16xf32, #tpu.memory_space<vmem>>, vector<8x16xf32>
    tpu.vector_store %arg6[%c0_25, %c0_26], %76 {strides = array<i32>} : memref<32x16xf32, #tpu.memory_space<vmem>>, vector<8x16xf32>,
    %c8 = arith.constant 8 : index
    %c0_27 = arith.constant 0 : index
    %78 = vector.load %arg5[%c8, %c0_27] : memref<96x16xf32, #tpu.memory_space<vmem>>, vector<8x16xf32>
    %c32_28 = arith.constant 32 : index
    %c0_29 = arith.constant 0 : index
    %79 = vector.load %arg5[%c32_28, %c0_29] : memref<96x16xf32, #tpu.memory_space<vmem>>, vector<8x16xf32>
    %80 = arith.mulf %78, %79 : vector<8x16xf32>
    %cst_30 = arith.constant dense<0.000000e+00> : vector<16xf32>
    %81 = vector.multi_reduction <add>, %80, %cst_30 [0] : vector<8x16xf32> to vector<16xf32>
    %82 = vector.shape_cast %81 : vector<16xf32> to vector<1x16xf32>
    %cst_31 = arith.constant 0.353553385 : f32
    %83 = vector.broadcast %cst_31 : f32 to vector<1x16xf32>
    %84 = arith.mulf %82, %83 : vector<1x16xf32>
    %cst_32 = arith.constant 1.000000e+00 : f32
    %85 = vector.broadcast %cst_32 : f32 to vector<1x16xf32>
    %c64_33 = arith.constant 64 : index
    %c0_34 = arith.constant 0 : index
    %86 = vector.load %arg5[%c64_33, %c0_34] : memref<96x16xf32, #tpu.memory_space<vmem>>, vector<8x16xf32>
    %c40_35 = arith.constant 40 : index
    %c0_36 = arith.constant 0 : index
    %87 = vector.load %arg5[%c40_35, %c0_36] : memref<96x16xf32, #tpu.memory_space<vmem>>, vector<8x16xf32>
    %88 = arith.mulf %78, %87 : vector<8x16xf32>
    %cst_37 = arith.constant dense<0.000000e+00> : vector<16xf32>
    %89 = vector.multi_reduction <add>, %88, %cst_37 [0] : vector<8x16xf32> to vector<16xf32>
    %90 = vector.shape_cast %89 : vector<16xf32> to vector<1x16xf32>
    %cst_38 = arith.constant 0.353553385 : f32
    %91 = vector.broadcast %cst_38 : f32 to vector<1x16xf32>
    %92 = arith.mulf %90, %91 : vector<1x16xf32>
    %93 = arith.maximumf %84, %92 : vector<1x16xf32>
    %94 = arith.subf %84, %93 : vector<1x16xf32>
    %95 = math.exp %94 : vector<1x16xf32>
    %96 = arith.subf %92, %93 : vector<1x16xf32>
    %97 = math.exp %96 : vector<1x16xf32>
    %98 = arith.mulf %85, %95 : vector<1x16xf32>
    %99 = arith.addf %98, %97 : vector<1x16xf32>
    %c72_39 = arith.constant 72 : index
    %c0_40 = arith.constant 0 : index
    %100 = vector.load %arg5[%c72_39, %c0_40] : memref<96x16xf32, #tpu.memory_space<vmem>>, vector<8x16xf32>
    %101 = vector.broadcast %95 : vector<1x16xf32> to vector<8x16xf32>
    %102 = arith.mulf %86, %101 : vector<8x16xf32>
    %103 = vector.broadcast %97 : vector<1x16xf32> to vector<8x16xf32>
    %104 = arith.mulf %103, %100 : vector<8x16xf32>
    %105 = arith.addf %102, %104 : vector<8x16xf32>
    %c48_41 = arith.constant 48 : index
    %c0_42 = arith.constant 0 : index
    %106 = vector.load %arg5[%c48_41, %c0_42] : memref<96x16xf32, #tpu.memory_space<vmem>>, vector<8x16xf32>
    %107 = arith.mulf %78, %106 : vector<8x16xf32>
    %cst_43 = arith.constant dense<0.000000e+00> : vector<16xf32>
    %108 = vector.multi_reduction <add>, %107, %cst_43 [0] : vector<8x16xf32> to vector<16xf32>
    %109 = vector.shape_cast %108 : vector<16xf32> to vector<1x16xf32>
    %cst_44 = arith.constant 0.353553385 : f32
    %110 = vector.broadcast %cst_44 : f32 to vector<1x16xf32>
    %111 = arith.mulf %109, %110 : vector<1x16xf32>
    %112 = arith.maximumf %93, %111 : vector<1x16xf32>
    %113 = arith.subf %93, %112 : vector<1x16xf32>
    %114 = math.exp %113 : vector<1x16xf32>
    %115 = arith.subf %111, %112 : vector<1x16xf32>
    %116 = math.exp %115 : vector<1x16xf32>
    %117 = arith.mulf %99, %114 : vector<1x16xf32>
    %118 = arith.addf %117, %116 : vector<1x16xf32>
    %c80_45 = arith.constant 80 : index
    %c0_46 = arith.constant 0 : index
    %119 = vector.load %arg5[%c80_45, %c0_46] : memref<96x16xf32, #tpu.memory_space<vmem>>, vector<8x16xf32>
    %120 = vector.broadcast %114 : vector<1x16xf32> to vector<8x16xf32>
    %121 = arith.mulf %105, %120 : vector<8x16xf32>
    %122 = vector.broadcast %116 : vector<1x16xf32> to vector<8x16xf32>
    %123 = arith.mulf %122, %119 : vector<8x16xf32>
    %124 = arith.addf %121, %123 : vector<8x16xf32>
    %c56_47 = arith.constant 56 : index
    %c0_48 = arith.constant 0 : index
    %125 = vector.load %arg5[%c56_47, %c0_48] : memref<96x16xf32, #tpu.memory_space<vmem>>, vector<8x16xf32>
    %126 = arith.mulf %78, %125 : vector<8x16xf32>
    %cst_49 = arith.constant dense<0.000000e+00> : vector<16xf32>
    %127 = vector.multi_reduction <add>, %126, %cst_49 [0] : vector<8x16xf32> to vector<16xf32>
    %128 = vector.shape_cast %127 : vector<16xf32> to vector<1x16xf32>
    %cst_50 = arith.constant 0.353553385 : f32
    %129 = vector.broadcast %cst_50 : f32 to vector<1x16xf32>
    %130 = arith.mulf %128, %129 : vector<1x16xf32>
    %131 = arith.maximumf %112, %130 : vector<1x16xf32>
    %132 = arith.subf %112, %131 : vector<1x16xf32>
    %133 = math.exp %132 : vector<1x16xf32>
    %134 = arith.subf %130, %131 : vector<1x16xf32>
    %135 = math.exp %134 : vector<1x16xf32>
    %136 = arith.mulf %118, %133 : vector<1x16xf32>
    %137 = arith.addf %136, %135 : vector<1x16xf32>
    %c88_51 = arith.constant 88 : index
    %c0_52 = arith.constant 0 : index
    %138 = vector.load %arg5[%c88_51, %c0_52] : memref<96x16xf32, #tpu.memory_space<vmem>>, vector<8x16xf32>
    %139 = vector.broadcast %133 : vector<1x16xf32> to vector<8x16xf32>
    %140 = arith.mulf %124, %139 : vector<8x16xf32>
    %141 = vector.broadcast %135 : vector<1x16xf32> to vector<8x16xf32>
    %142 = arith.mulf %141, %138 : vector<8x16xf32>
    %143 = arith.addf %140, %142 : vector<8x16xf32>
    %144 = tpu.reciprocal %137 {approx = true} : vector<1x16xf32> -> vector<1x16xf32>
    %145 = arith.mulf %137, %144 : vector<1x16xf32>
    %cst_53 = arith.constant 2.000000e+00 : f32
    %146 = vector.broadcast %cst_53 : f32 to vector<1x16xf32>
    %147 = arith.subf %146, %145 : vector<1x16xf32>
    %148 = arith.mulf %144, %147 : vector<1x16xf32>
    %149 = vector.broadcast %148 : vector<1x16xf32> to vector<8x16xf32>
    %150 = arith.mulf %143, %149 : vector<8x16xf32>
    %c8_54 = arith.constant 8 : index
    %c0_55 = arith.constant 0 : index
    %151 = vector.load %arg6[%c8_54, %c0_55] : memref<32x16xf32, #tpu.memory_space<vmem>>, vector<8x16xf32>
    tpu.vector_store %arg6[%c8_54, %c0_55], %150 {strides = array<i32>} : memref<32x16xf32, #tpu.memory_space<vmem>>, vector<8x16xf32>,
    %c16 = arith.constant 16 : index
    %c0_56 = arith.constant 0 : index
    %152 = vector.load %arg5[%c16, %c0_56] : memref<96x16xf32, #tpu.memory_space<vmem>>, vector<8x16xf32>
    %c32_57 = arith.constant 32 : index
    %c0_58 = arith.constant 0 : index
    %153 = vector.load %arg5[%c32_57, %c0_58] : memref<96x16xf32, #tpu.memory_space<vmem>>, vector<8x16xf32>
    %154 = arith.mulf %152, %153 : vector<8x16xf32>
    %cst_59 = arith.constant dense<0.000000e+00> : vector<16xf32>
    %155 = vector.multi_reduction <add>, %154, %cst_59 [0] : vector<8x16xf32> to vector<16xf32>
    %156 = vector.shape_cast %155 : vector<16xf32> to vector<1x16xf32>
    %cst_60 = arith.constant 0.353553385 : f32
    %157 = vector.broadcast %cst_60 : f32 to vector<1x16xf32>
    %158 = arith.mulf %156, %157 : vector<1x16xf32>
    %cst_61 = arith.constant 1.000000e+00 : f32
    %159 = vector.broadcast %cst_61 : f32 to vector<1x16xf32>
    %c64_62 = arith.constant 64 : index
    %c0_63 = arith.constant 0 : index
    %160 = vector.load %arg5[%c64_62, %c0_63] : memref<96x16xf32, #tpu.memory_space<vmem>>, vector<8x16xf32>
    %c40_64 = arith.constant 40 : index
    %c0_65 = arith.constant 0 : index
    %161 = vector.load %arg5[%c40_64, %c0_65] : memref<96x16xf32, #tpu.memory_space<vmem>>, vector<8x16xf32>
    %162 = arith.mulf %152, %161 : vector<8x16xf32>
    %cst_66 = arith.constant dense<0.000000e+00> : vector<16xf32>
    %163 = vector.multi_reduction <add>, %162, %cst_66 [0] : vector<8x16xf32> to vector<16xf32>
    %164 = vector.shape_cast %163 : vector<16xf32> to vector<1x16xf32>
    %cst_67 = arith.constant 0.353553385 : f32
    %165 = vector.broadcast %cst_67 : f32 to vector<1x16xf32>
    %166 = arith.mulf %164, %165 : vector<1x16xf32>
    %167 = arith.maximumf %158, %166 : vector<1x16xf32>
    %168 = arith.subf %158, %167 : vector<1x16xf32>
    %169 = math.exp %168 : vector<1x16xf32>
    %170 = arith.subf %166, %167 : vector<1x16xf32>
    %171 = math.exp %170 : vector<1x16xf32>
    %172 = arith.mulf %159, %169 : vector<1x16xf32>
    %173 = arith.addf %172, %171 : vector<1x16xf32>
    %c72_68 = arith.constant 72 : index
    %c0_69 = arith.constant 0 : index
    %174 = vector.load %arg5[%c72_68, %c0_69] : memref<96x16xf32, #tpu.memory_space<vmem>>, vector<8x16xf32>
    %175 = vector.broadcast %169 : vector<1x16xf32> to vector<8x16xf32>
    %176 = arith.mulf %160, %175 : vector<8x16xf32>
    %177 = vector.broadcast %171 : vector<1x16xf32> to vector<8x16xf32>
    %178 = arith.mulf %177, %174 : vector<8x16xf32>
    %179 = arith.addf %176, %178 : vector<8x16xf32>
    %c48_70 = arith.constant 48 : index
    %c0_71 = arith.constant 0 : index
    %180 = vector.load %arg5[%c48_70, %c0_71] : memref<96x16xf32, #tpu.memory_space<vmem>>, vector<8x16xf32>
    %181 = arith.mulf %152, %180 : vector<8x16xf32>
    %cst_72 = arith.constant dense<0.000000e+00> : vector<16xf32>
    %182 = vector.multi_reduction <add>, %181, %cst_72 [0] : vector<8x16xf32> to vector<16xf32>
    %183 = vector.shape_cast %182 : vector<16xf32> to vector<1x16xf32>
    %cst_73 = arith.constant 0.353553385 : f32
    %184 = vector.broadcast %cst_73 : f32 to vector<1x16xf32>
    %185 = arith.mulf %183, %184 : vector<1x16xf32>
    %186 = arith.maximumf %167, %185 : vector<1x16xf32>
    %187 = arith.subf %167, %186 : vector<1x16xf32>
    %188 = math.exp %187 : vector<1x16xf32>
    %189 = arith.subf %185, %186 : vector<1x16xf32>
    %190 = math.exp %189 : vector<1x16xf32>
    %191 = arith.mulf %173, %188 : vector<1x16xf32>
    %192 = arith.addf %191, %190 : vector<1x16xf32>
    %c80_74 = arith.constant 80 : index
    %c0_75 = arith.constant 0 : index
    %193 = vector.load %arg5[%c80_74, %c0_75] : memref<96x16xf32, #tpu.memory_space<vmem>>, vector<8x16xf32>
    %194 = vector.broadcast %188 : vector<1x16xf32> to vector<8x16xf32>
    %195 = arith.mulf %179, %194 : vector<8x16xf32>
    %196 = vector.broadcast %190 : vector<1x16xf32> to vector<8x16xf32>
    %197 = arith.mulf %196, %193 : vector<8x16xf32>
    %198 = arith.addf %195, %197 : vector<8x16xf32>
    %c56_76 = arith.constant 56 : index
    %c0_77 = arith.constant 0 : index
    %199 = vector.load %arg5[%c56_76, %c0_77] : memref<96x16xf32, #tpu.memory_space<vmem>>, vector<8x16xf32>
    %200 = arith.mulf %152, %199 : vector<8x16xf32>
    %cst_78 = arith.constant dense<0.000000e+00> : vector<16xf32>
    %201 = vector.multi_reduction <add>, %200, %cst_78 [0] : vector<8x16xf32> to vector<16xf32>
    %202 = vector.shape_cast %201 : vector<16xf32> to vector<1x16xf32>
    %cst_79 = arith.constant 0.353553385 : f32
    %203 = vector.broadcast %cst_79 : f32 to vector<1x16xf32>
    %204 = arith.mulf %202, %203 : vector<1x16xf32>
    %205 = arith.maximumf %186, %204 : vector<1x16xf32>
    %206 = arith.subf %186, %205 : vector<1x16xf32>
    %207 = math.exp %206 : vector<1x16xf32>
    %208 = arith.subf %204, %205 : vector<1x16xf32>
    %209 = math.exp %208 : vector<1x16xf32>
    %210 = arith.mulf %192, %207 : vector<1x16xf32>
    %211 = arith.addf %210, %209 : vector<1x16xf32>
    %c88_80 = arith.constant 88 : index
    %c0_81 = arith.constant 0 : index
    %212 = vector.load %arg5[%c88_80, %c0_81] : memref<96x16xf32, #tpu.memory_space<vmem>>, vector<8x16xf32>
    %213 = vector.broadcast %207 : vector<1x16xf32> to vector<8x16xf32>
    %214 = arith.mulf %198, %213 : vector<8x16xf32>
    %215 = vector.broadcast %209 : vector<1x16xf32> to vector<8x16xf32>
    %216 = arith.mulf %215, %212 : vector<8x16xf32>
    %217 = arith.addf %214, %216 : vector<8x16xf32>
    %218 = tpu.reciprocal %211 {approx = true} : vector<1x16xf32> -> vector<1x16xf32>
    %219 = arith.mulf %211, %218 : vector<1x16xf32>
    %cst_82 = arith.constant 2.000000e+00 : f32
    %220 = vector.broadcast %cst_82 : f32 to vector<1x16xf32>
    %221 = arith.subf %220, %219 : vector<1x16xf32>
    %222 = arith.mulf %218, %221 : vector<1x16xf32>
    %223 = vector.broadcast %222 : vector<1x16xf32> to vector<8x16xf32>
    %224 = arith.mulf %217, %223 : vector<8x16xf32>
    %c16_83 = arith.constant 16 : index
    %c0_84 = arith.constant 0 : index
    %225 = vector.load %arg6[%c16_83, %c0_84] : memref<32x16xf32, #tpu.memory_space<vmem>>, vector<8x16xf32>
    tpu.vector_store %arg6[%c16_83, %c0_84], %224 {strides = array<i32>} : memref<32x16xf32, #tpu.memory_space<vmem>>, vector<8x16xf32>,
    %c24 = arith.constant 24 : index
    %c0_85 = arith.constant 0 : index
    %226 = vector.load %arg5[%c24, %c0_85] : memref<96x16xf32, #tpu.memory_space<vmem>>, vector<8x16xf32>
    %c32_86 = arith.constant 32 : index
    %c0_87 = arith.constant 0 : index
    %227 = vector.load %arg5[%c32_86, %c0_87] : memref<96x16xf32, #tpu.memory_space<vmem>>, vector<8x16xf32>
    %228 = arith.mulf %226, %227 : vector<8x16xf32>
    %cst_88 = arith.constant dense<0.000000e+00> : vector<16xf32>
    %229 = vector.multi_reduction <add>, %228, %cst_88 [0] : vector<8x16xf32> to vector<16xf32>
    %230 = vector.shape_cast %229 : vector<16xf32> to vector<1x16xf32>
    %cst_89 = arith.constant 0.353553385 : f32
    %231 = vector.broadcast %cst_89 : f32 to vector<1x16xf32>
    %232 = arith.mulf %230, %231 : vector<1x16xf32>
    %cst_90 = arith.constant 1.000000e+00 : f32
    %233 = vector.broadcast %cst_90 : f32 to vector<1x16xf32>
    %c64_91 = arith.constant 64 : index
    %c0_92 = arith.constant 0 : index
    %234 = vector.load %arg5[%c64_91, %c0_92] : memref<96x16xf32, #tpu.memory_space<vmem>>, vector<8x16xf32>
    %c40_93 = arith.constant 40 : index
    %c0_94 = arith.constant 0 : index
    %235 = vector.load %arg5[%c40_93, %c0_94] : memref<96x16xf32, #tpu.memory_space<vmem>>, vector<8x16xf32>
    %236 = arith.mulf %226, %235 : vector<8x16xf32>
    %cst_95 = arith.constant dense<0.000000e+00> : vector<16xf32>
    %237 = vector.multi_reduction <add>, %236, %cst_95 [0] : vector<8x16xf32> to vector<16xf32>
    %238 = vector.shape_cast %237 : vector<16xf32> to vector<1x16xf32>
    %cst_96 = arith.constant 0.353553385 : f32
    %239 = vector.broadcast %cst_96 : f32 to vector<1x16xf32>
    %240 = arith.mulf %238, %239 : vector<1x16xf32>
    %241 = arith.maximumf %232, %240 : vector<1x16xf32>
    %242 = arith.subf %232, %241 : vector<1x16xf32>
    %243 = math.exp %242 : vector<1x16xf32>
    %244 = arith.subf %240, %241 : vector<1x16xf32>
    %245 = math.exp %244 : vector<1x16xf32>
    %246 = arith.mulf %233, %243 : vector<1x16xf32>
    %247 = arith.addf %246, %245 : vector<1x16xf32>
    %c72_97 = arith.constant 72 : index
    %c0_98 = arith.constant 0 : index
    %248 = vector.load %arg5[%c72_97, %c0_98] : memref<96x16xf32, #tpu.memory_space<vmem>>, vector<8x16xf32>
    %249 = vector.broadcast %243 : vector<1x16xf32> to vector<8x16xf32>
    %250 = arith.mulf %234, %249 : vector<8x16xf32>
    %251 = vector.broadcast %245 : vector<1x16xf32> to vector<8x16xf32>
    %252 = arith.mulf %251, %248 : vector<8x16xf32>
    %253 = arith.addf %250, %252 : vector<8x16xf32>
    %c48_99 = arith.constant 48 : index
    %c0_100 = arith.constant 0 : index
    %254 = vector.load %arg5[%c48_99, %c0_100] : memref<96x16xf32, #tpu.memory_space<vmem>>, vector<8x16xf32>
    %255 = arith.mulf %226, %254 : vector<8x16xf32>
    %cst_101 = arith.constant dense<0.000000e+00> : vector<16xf32>
    %256 = vector.multi_reduction <add>, %255, %cst_101 [0] : vector<8x16xf32> to vector<16xf32>
    %257 = vector.shape_cast %256 : vector<16xf32> to vector<1x16xf32>
    %cst_102 = arith.constant 0.353553385 : f32
    %258 = vector.broadcast %cst_102 : f32 to vector<1x16xf32>
    %259 = arith.mulf %257, %258 : vector<1x16xf32>
    %260 = arith.maximumf %241, %259 : vector<1x16xf32>
    %261 = arith.subf %241, %260 : vector<1x16xf32>
    %262 = math.exp %261 : vector<1x16xf32>
    %263 = arith.subf %259, %260 : vector<1x16xf32>
    %264 = math.exp %263 : vector<1x16xf32>
    %265 = arith.mulf %247, %262 : vector<1x16xf32>
    %266 = arith.addf %265, %264 : vector<1x16xf32>
    %c80_103 = arith.constant 80 : index
    %c0_104 = arith.constant 0 : index
    %267 = vector.load %arg5[%c80_103, %c0_104] : memref<96x16xf32, #tpu.memory_space<vmem>>, vector<8x16xf32>
    %268 = vector.broadcast %262 : vector<1x16xf32> to vector<8x16xf32>
    %269 = arith.mulf %253, %268 : vector<8x16xf32>
    %270 = vector.broadcast %264 : vector<1x16xf32> to vector<8x16xf32>
    %271 = arith.mulf %270, %267 : vector<8x16xf32>
    %272 = arith.addf %269, %271 : vector<8x16xf32>
    %c56_105 = arith.constant 56 : index
    %c0_106 = arith.constant 0 : index
    %273 = vector.load %arg5[%c56_105, %c0_106] : memref<96x16xf32, #tpu.memory_space<vmem>>, vector<8x16xf32>
    %274 = arith.mulf %226, %273 : vector<8x16xf32>
    %cst_107 = arith.constant dense<0.000000e+00> : vector<16xf32>
    %275 = vector.multi_reduction <add>, %274, %cst_107 [0] : vector<8x16xf32> to vector<16xf32>
    %276 = vector.shape_cast %275 : vector<16xf32> to vector<1x16xf32>
    %cst_108 = arith.constant 0.353553385 : f32
    %277 = vector.broadcast %cst_108 : f32 to vector<1x16xf32>
    %278 = arith.mulf %276, %277 : vector<1x16xf32>
    %279 = arith.maximumf %260, %278 : vector<1x16xf32>
    %280 = arith.subf %260, %279 : vector<1x16xf32>
    %281 = math.exp %280 : vector<1x16xf32>
    %282 = arith.subf %278, %279 : vector<1x16xf32>
    %283 = math.exp %282 : vector<1x16xf32>
    %284 = arith.mulf %266, %281 : vector<1x16xf32>
    %285 = arith.addf %284, %283 : vector<1x16xf32>
    %c88_109 = arith.constant 88 : index
    %c0_110 = arith.constant 0 : index
    %286 = vector.load %arg5[%c88_109, %c0_110] : memref<96x16xf32, #tpu.memory_space<vmem>>, vector<8x16xf32>
    %287 = vector.broadcast %281 : vector<1x16xf32> to vector<8x16xf32>
    %288 = arith.mulf %272, %287 : vector<8x16xf32>
    %289 = vector.broadcast %283 : vector<1x16xf32> to vector<8x16xf32>
    %290 = arith.mulf %289, %286 : vector<8x16xf32>
    %291 = arith.addf %288, %290 : vector<8x16xf32>
    %292 = tpu.reciprocal %285 {approx = true} : vector<1x16xf32> -> vector<1x16xf32>
    %293 = arith.mulf %285, %292 : vector<1x16xf32>
    %cst_111 = arith.constant 2.000000e+00 : f32
    %294 = vector.broadcast %cst_111 : f32 to vector<1x16xf32>
    %295 = arith.subf %294, %293 : vector<1x16xf32>
    %296 = arith.mulf %292, %295 : vector<1x16xf32>
    %297 = vector.broadcast %296 : vector<1x16xf32> to vector<8x16xf32>
    %298 = arith.mulf %291, %297 : vector<8x16xf32>
    %c24_112 = arith.constant 24 : index
    %c0_113 = arith.constant 0 : index
    %299 = vector.load %arg6[%c24_112, %c0_113] : memref<32x16xf32, #tpu.memory_space<vmem>>, vector<8x16xf32>
    tpu.vector_store %arg6[%c24_112, %c0_113], %298 {strides = array<i32>} : memref<32x16xf32, #tpu.memory_space<vmem>>, vector<8x16xf32>,
    %c0_114 = arith.constant 0 : index
    %c0_115 = arith.constant 0 : index
    %300 = vector.load %arg3[%c0_114, %c0_115] : memref<32x32xf32, #tpu.memory_space<vmem>>, vector<32x32xf32>
    %c0_116 = arith.constant 0 : index
    %c0_117 = arith.constant 0 : index
    %301 = vector.load %arg6[%c0_116, %c0_117] : memref<32x16xf32, #tpu.memory_space<vmem>>, vector<32x16xf32>
    %cst_118 = arith.constant dense<0.000000e+00> : vector<32x16xf32>
    %302 = tpu.matmul %300, %301, %cst_118 {dimension_numbers = #tpu.dot_dimension_numbers<[1], [0], [0], [1], [0, 0, 1, 1], [], []>} : vector<32x32xf32>, vector<32x16xf32>, vector<32x16xf32> -> vector<32x16xf32>
    %c0_119 = arith.constant 0 : index
    %c0_120 = arith.constant 0 : index
    %303 = vector.load %arg4[%c0_119, %c0_120] : memref<32x16xf32, #tpu.memory_space<vmem>>, vector<32x16xf32>
    tpu.vector_store %arg4[%c0_119, %c0_120], %302 {strides = array<i32>} : memref<32x16xf32, #tpu.memory_space<vmem>>, vector<32x16xf32>,
    return
  }
  func.func @transform_0(%arg0: i32) -> (i32, i32) {
    %c0_i32 = arith.constant 0 : i32
    %c0_i32_0 = arith.constant 0 : i32
    return %arg0, %c0_i32 : i32, i32
  }
  func.func @transform_1(%arg0: i32) -> (i32, i32) {
    %c0_i32 = arith.constant 0 : i32
    %c0_i32_0 = arith.constant 0 : i32
    %c0_i32_1 = arith.constant 0 : i32
    return %c0_i32, %c0_i32_0 : i32, i32
  }
  func.func @transform_2(%arg0: i32) -> (i32, i32) {
    %c0_i32 = arith.constant 0 : i32
    %c0_i32_0 = arith.constant 0 : i32
    %c0_i32_1 = arith.constant 0 : i32
    return %c0_i32, %c0_i32_0 : i32, i32
  }
  func.func @transform_3(%arg0: i32) -> (i32, i32) {
    %c0_i32 = arith.constant 0 : i32
    %c0_i32_0 = arith.constant 0 : i32
    return %c0_i32, %arg0 : i32, i32
  }
}

</mosaic_0001>

<llo_original>
// kernel: tpu_custom_call.1
$region0: #{tpu_custom_call.1}
  #allocation0 [shape = 'u32[]', space=smem, size = 0x4, offset = 0x4, fixed_abs, tag = 'smem constant byte address 0x4 - core index']
  #allocation1 [shape = 'u32[72,128]{1,0:T(1,128)}', space=vmem, size = 0x9000, scoped, tag = 'internal scratch']
  #allocation2 [shape = 'f32[96,16]{1,0:T(8,128)}', space=vmem, size = 0xc000, scoped, tag = 'scratch operand']
  #allocation3 [shape = 'f32[32,16]{1,0:T(8,128)}', space=vmem, size = 0x4000, scoped, tag = 'scratch operand']
  %s0 = inlined_call_operand.vmem [shape: f32[16,32], index: 0, kind: input, shape index: {}]
  %s1 = inlined_call_operand.vmem [shape: f32[96,32], index: 1, kind: input, shape index: {}]
  %s2 = inlined_call_operand.vmem [shape: f32[32,32], index: 2, kind: input, shape index: {}]
  %s3 = inlined_call_operand.vmem [shape: f32[32,16], index: 3, kind: output, shape index: {}]
  %s4 = sld [smem:[#allocation0]]
  $region22: #{tpu_custom_call.1} parent=0
    _
  %s6 = ssub.s32 1, %s4
  %s7 = scalar_select 0, %s6, %s4
  // Predicated region
  $region2: #{tpu_custom_call.1} parent=0 // pred_check
    _
  $region3: #{tpu_custom_call.1} parent=0 // pred_check_branch
    %9 = sbr.rel (0) target = $region5
  $region4: #{tpu_custom_call.1} parent=0 // pred_region
    _
  $region5: #{tpu_custom_call.1} parent=0 // pred_fallthru
    _
  // Predicated region
  $region6: #{tpu_custom_call.1} parent=0 // pred_check
    _
  $region7: #{tpu_custom_call.1} parent=0 // pred_check_branch
    %11 = sbr.rel (0) target = $region9
  $region8: #{tpu_custom_call.1} parent=0 // pred_region
    _
  $region9: #{tpu_custom_call.1} parent=0 // pred_fallthru
    _
  // Predicated region
  $region10: #{tpu_custom_call.1} parent=0 // pred_check
    _
  $region11: #{tpu_custom_call.1} parent=0 // pred_check_branch
    %13 = sbr.rel (0) target = $region13
  $region12: #{tpu_custom_call.1} parent=0 // pred_region
    _
  $region13: #{tpu_custom_call.1} parent=0 // pred_fallthru
    _
  %v14 = vld [vmem:[%s1] sm:$0xff]
  %v15 = vld [vmem:[%s1 + $0x8] sm:$0xff]
  %v16 = vld [vmem:[%s1 + $0x10] sm:$0xff]
  %v17 = vld [vmem:[%s1 + $0x18] sm:$0xff]
  %v18 = vld [vmem:[%s1 + $0x20] sm:$0xff]
  %v19 = vld [vmem:[%s1 + $0x28] sm:$0xff]
  %v20 = vld [vmem:[%s1 + $0x30] sm:$0xff]
  %v21 = vld [vmem:[%s1 + $0x38] sm:$0xff]
  %v22 = vld [vmem:[%s1 + $0x40] sm:$0xff]
  %v23 = vld [vmem:[%s1 + $0x48] sm:$0xff]
  %v24 = vld [vmem:[%s1 + $0x50] sm:$0xff]
  %v25 = vld [vmem:[%s1 + $0x58] sm:$0xff]
  %v26 = vld [vmem:[%s0] sm:$0xff]
  %v27 = vld [vmem:[%s0 + $0x8] sm:$0xff]
  %vm28 = vcmask 261120
  %v30 = vsel %vm28, %v14, 0
  %v33 = vsel %vm28, %v15, 0
  %v36 = vsel %vm28, %v16, 0
  %v39 = vsel %vm28, %v17, 0
  %v42 = vsel %vm28, %v18, 0
  %v45 = vsel %vm28, %v19, 0
  %v48 = vsel %vm28, %v20, 0
  %v51 = vsel %vm28, %v21, 0
  %v54 = vsel %vm28, %v22, 0
  %v57 = vsel %vm28, %v23, 0
  %v60 = vsel %vm28, %v24, 0
  %v63 = vsel %vm28, %v25, 0
  %v66 = vsel %vm28, %v26, 0
  %v69 = vsel %vm28, %v27, 0
  %71 = vmatpush.xpose.msra.mxu0 0.0
  %72 = vmatpush.xpose.msra.mxu0 0.0
  %73 = vmatpush.xpose.msra.mxu0 0.0
  %74 = vmatpush.xpose.msra.mxu0 0.0
  %75 = vmatpush.xpose.msra.mxu0 0.0
  %76 = vmatpush.xpose.msra.mxu0 0.0
  %77 = vmatpush.xpose.msra.mxu0 0.0
  %78 = vmatpush.xpose.msra.mxu0 0.0
  %79 = vmatpush.xpose.msra.mxu0 0.0
  %80 = vmatpush.xpose.msra.mxu0 0.0
  %81 = vmatpush.xpose.msra.mxu0 0.0
  %82 = vmatpush.xpose.msra.mxu0 0.0
  %83 = vmatpush.xpose.msra.mxu0 0.0
  %84 = vmatpush.xpose.msra.mxu0 0.0
  %85 = vmatpush.xpose.msra.mxu0 %v69
  %86 = vmatpush.xpose.msra.mxu0 %v66
  %87 = vmatmul.f32.gmra.mxu0 %v30
  %v88 = vpop.f32.mrf.mxu0
  %v89 = vadd.f32 0.0, %v88
  %90 = vmatmul.f32.gmra.mxu0 %v33
  %v91 = vpop.f32.mrf.mxu0
  %v92 = vadd.f32 0.0, %v91
  %93 = vmatmul.f32.gmra.mxu0 %v36
  %v94 = vpop.f32.mrf.mxu0
  %v95 = vadd.f32 0.0, %v94
  %96 = vmatmul.f32.gmra.mxu0 %v39
  %v97 = vpop.f32.mrf.mxu0
  %v98 = vadd.f32 0.0, %v97
  %99 = vmatmul.f32.gmra.mxu0 %v42
  %v100 = vpop.f32.mrf.mxu0
  %v101 = vadd.f32 0.0, %v100
  %102 = vmatmul.f32.gmra.mxu0 %v45
  %v103 = vpop.f32.mrf.mxu0
  %v104 = vadd.f32 0.0, %v103
  %105 = vmatmul.f32.gmra.mxu0 %v48
  %v106 = vpop.f32.mrf.mxu0
  %v107 = vadd.f32 0.0, %v106
  %108 = vmatmul.f32.gmra.mxu0 %v51
  %v109 = vpop.f32.mrf.mxu0
  %v110 = vadd.f32 0.0, %v109
  %111 = vmatmul.f32.gmra.mxu0 %v54
  %v112 = vpop.f32.mrf.mxu0
  %v113 = vadd.f32 0.0, %v112
  %114 = vmatmul.f32.gmra.mxu0 %v57
  %v115 = vpop.f32.mrf.mxu0
  %v116 = vadd.f32 0.0, %v115
  %117 = vmatmul.f32.gmra.mxu0 %v60
  %v118 = vpop.f32.mrf.mxu0
  %v119 = vadd.f32 0.0, %v118
  %120 = vmatmul.f32.gmra.mxu0 %v63
  %v121 = vpop.f32.mrf.mxu0
  %v122 = vadd.f32 0.0, %v121
  %123 = vdwg.mxu0
  %vm124 = vcmask 130048
  %125 = vst.msk [vmem:[#allocation2] sm:$0xff] %vm124, %v89
  %126 = vst.msk [vmem:[#allocation2 + $0x8] sm:$0xff] %vm124, %v92
  %127 = vst.msk [vmem:[#allocation2 + $0x10] sm:$0xff] %vm124, %v95
  %128 = vst.msk [vmem:[#allocation2 + $0x18] sm:$0xff] %vm124, %v98
  %129 = vst.msk [vmem:[#allocation2 + $0x20] sm:$0xff] %vm124, %v101
  %130 = vst.msk [vmem:[#allocation2 + $0x28] sm:$0xff] %vm124, %v104
  %131 = vst.msk [vmem:[#allocation2 + $0x30] sm:$0xff] %vm124, %v107
  %132 = vst.msk [vmem:[#allocation2 + $0x38] sm:$0xff] %vm124, %v110
  %133 = vst.msk [vmem:[#allocation2 + $0x40] sm:$0xff] %vm124, %v113
  %134 = vst.msk [vmem:[#allocation2 + $0x48] sm:$0xff] %vm124, %v116
  %135 = vst.msk [vmem:[#allocation2 + $0x50] sm:$0xff] %vm124, %v119
  %136 = vst.msk [vmem:[#allocation2 + $0x58] sm:$0xff] %vm124, %v122
  %v137 = vld [vmem:[#allocation2] sm:$0xff]
  %v138 = vld [vmem:[#allocation2 + $0x20] sm:$0xff]
  %v139 = vmul.f32 %v137, %v138
  %v140 = vsel %vm124, %v139, 0.0
  %v141 = vrot.slane %v140, 4
  %v142 = vadd.f32 %v140, %v141
  %v143 = vrot.slane %v142, 2
  %v144 = vadd.f32 %v142, %v143
  %v145 = vrot.slane %v144, 1
  %v146 = vadd.f32 %v144, %v145
  %v147 = vmul.f32 %v146, 0.35355338
  %v148 = vld [vmem:[#allocation2 + $0x40] sm:$0xff]
  %v149 = vld [vmem:[#allocation2 + $0x28] sm:$0xff]
  %v150 = vmul.f32 %v137, %v149
  %v151 = vsel %vm124, %v150, 0.0
  %v152 = vrot.slane %v151, 4
  %v153 = vadd.f32 %v151, %v152
  %v154 = vrot.slane %v153, 2
  %v155 = vadd.f32 %v153, %v154
  %v156 = vrot.slane %v155, 1
  %v157 = vadd.f32 %v155, %v156
  %v158 = vmul.f32 %v157, 0.35355338
  %v159 = vmax.f32 %v147, %v158
  %v160 = vsub.f32 %v147, %v159
  %v161 = vmul.f32 %v160, 1.442695
  %v162 = vpow.pop %v161
  %v163 = vsub.f32 %v158, %v159
  %v164 = vmul.f32 %v163, 1.442695
  %v165 = vpow.pop %v164
  %v166 = vadd.f32 %v162, %v165
  %v167 = vld [vmem:[#allocation2 + $0x48] sm:$0xff]
  %v168 = vmul.f32 %v148, %v162
  %v169 = vmul.f32 %v165, %v167
  %v170 = vadd.f32 %v168, %v169
  %v171 = vld [vmem:[#allocation2 + $0x30] sm:$0xff]
  %v172 = vmul.f32 %v137, %v171
  %v173 = vsel %vm124, %v172, 0.0
  %v174 = vrot.slane %v173, 4
  %v175 = vadd.f32 %v173, %v174
  %v176 = vrot.slane %v175, 2
  %v177 = vadd.f32 %v175, %v176
  %v178 = vrot.slane %v177, 1
  %v179 = vadd.f32 %v177, %v178
  %v180 = vmul.f32 %v179, 0.35355338
  %v181 = vmax.f32 %v159, %v180
  %v182 = vsub.f32 %v159, %v181
  %v183 = vmul.f32 %v182, 1.442695
  %v184 = vpow.pop %v183
  %v185 = vsub.f32 %v180, %v181
  %v186 = vmul.f32 %v185, 1.442695
  %v187 = vpow.pop %v186
  %v188 = vmul.f32 %v166, %v184
  %v189 = vadd.f32 %v188, %v187
  %v190 = vld [vmem:[#allocation2 + $0x50] sm:$0xff]
  %v191 = vmul.f32 %v170, %v184
  %v192 = vmul.f32 %v187, %v190
  %v193 = vadd.f32 %v191, %v192
  %v194 = vld [vmem:[#allocation2 + $0x38] sm:$0xff]
  %v195 = vmul.f32 %v137, %v194
  %v196 = vsel %vm124, %v195, 0.0
  %v197 = vrot.slane %v196, 4
  %v198 = vadd.f32 %v196, %v197
  %v199 = vrot.slane %v198, 2
  %v200 = vadd.f32 %v198, %v199
  %v201 = vrot.slane %v200, 1
  %v202 = vadd.f32 %v200, %v201
  %v203 = vmul.f32 %v202, 0.35355338
  %v204 = vmax.f32 %v181, %v203
  %v205 = vsub.f32 %v181, %v204
  %v206 = vmul.f32 %v205, 1.442695
  %v207 = vpow.pop %v206
  %v208 = vsub.f32 %v203, %v204
  %v209 = vmul.f32 %v208, 1.442695
  %v210 = vpow.pop %v209
  %v211 = vmul.f32 %v189, %v207
  %v212 = vadd.f32 %v211, %v210
  %v213 = vld [vmem:[#allocation2 + $0x58] sm:$0xff]
  %v214 = vmul.f32 %v193, %v207
  %v215 = vmul.f32 %v210, %v213
  %v216 = vadd.f32 %v214, %v215
  %v217 = vrcp.pop %v212
  %v218 = vmul.f32 %v212, %v217
  %v219 = vsub.f32 2.0, %v218
  %v220 = vmul.f32 %v217, %v219
  %v221 = vmul.f32 %v216, %v220
  %222 = vst.msk [vmem:[#allocation3] sm:$0xff] %vm124, %v221
  %v223 = vld [vmem:[#allocation2 + $0x8] sm:$0xff]
  %v224 = vld [vmem:[#allocation2 + $0x20] sm:$0xff]
  %v225 = vmul.f32 %v223, %v224
  %v226 = vsel %vm124, %v225, 0.0
  %v227 = vrot.slane %v226, 4
  %v228 = vadd.f32 %v226, %v227
  %v229 = vrot.slane %v228, 2
  %v230 = vadd.f32 %v228, %v229
  %v231 = vrot.slane %v230, 1
  %v232 = vadd.f32 %v230, %v231
  %v233 = vmul.f32 %v232, 0.35355338
  %v234 = vld [vmem:[#allocation2 + $0x40] sm:$0xff]
  %v235 = vld [vmem:[#allocation2 + $0x28] sm:$0xff]
  %v236 = vmul.f32 %v223, %v235
  %v237 = vsel %vm124, %v236, 0.0
  %v238 = vrot.slane %v237, 4
  %v239 = vadd.f32 %v237, %v238
  %v240 = vrot.slane %v239, 2
  %v241 = vadd.f32 %v239, %v240
  %v242 = vrot.slane %v241, 1
  %v243 = vadd.f32 %v241, %v242
  %v244 = vmul.f32 %v243, 0.35355338
  %v245 = vmax.f32 %v233, %v244
  %v246 = vsub.f32 %v233, %v245
  %v247 = vmul.f32 %v246, 1.442695
  %v248 = vpow.pop %v247
  %v249 = vsub.f32 %v244, %v245
  %v250 = vmul.f32 %v249, 1.442695
  %v251 = vpow.pop %v250
  %v252 = vadd.f32 %v248, %v251
  %v253 = vld [vmem:[#allocation2 + $0x48] sm:$0xff]
  %v254 = vmul.f32 %v234, %v248
  %v255 = vmul.f32 %v251, %v253
  %v256 = vadd.f32 %v254, %v255
  %v257 = vld [vmem:[#allocation2 + $0x30] sm:$0xff]
  %v258 = vmul.f32 %v223, %v257
  %v259 = vsel %vm124, %v258, 0.0
  %v260 = vrot.slane %v259, 4
  %v261 = vadd.f32 %v259, %v260
  %v262 = vrot.slane %v261, 2
  %v263 = vadd.f32 %v261, %v262
  %v264 = vrot.slane %v263, 1
  %v265 = vadd.f32 %v263, %v264
  %v266 = vmul.f32 %v265, 0.35355338
  %v267 = vmax.f32 %v245, %v266
  %v268 = vsub.f32 %v245, %v267
  %v269 = vmul.f32 %v268, 1.442695
  %v270 = vpow.pop %v269
  %v271 = vsub.f32 %v266, %v267
  %v272 = vmul.f32 %v271, 1.442695
  %v273 = vpow.pop %v272
  %v274 = vmul.f32 %v252, %v270
  %v275 = vadd.f32 %v274, %v273
  %v276 = vld [vmem:[#allocation2 + $0x50] sm:$0xff]
  %v277 = vmul.f32 %v256, %v270
  %v278 = vmul.f32 %v273, %v276
  %v279 = vadd.f32 %v277, %v278
  %v280 = vld [vmem:[#allocation2 + $0x38] sm:$0xff]
  %v281 = vmul.f32 %v223, %v280
  %v282 = vsel %vm124, %v281, 0.0
  %v283 = vrot.slane %v282, 4
  %v284 = vadd.f32 %v282, %v283
  %v285 = vrot.slane %v284, 2
  %v286 = vadd.f32 %v284, %v285
  %v287 = vrot.slane %v286, 1
  %v288 = vadd.f32 %v286, %v287
  %v289 = vmul.f32 %v288, 0.35355338
  %v290 = vmax.f32 %v267, %v289
  %v291 = vsub.f32 %v267, %v290
  %v292 = vmul.f32 %v291, 1.442695
  %v293 = vpow.pop %v292
  %v294 = vsub.f32 %v289, %v290
  %v295 = vmul.f32 %v294, 1.442695
  %v296 = vpow.pop %v295
  %v297 = vmul.f32 %v275, %v293
  %v298 = vadd.f32 %v297, %v296
  %v299 = vld [vmem:[#allocation2 + $0x58] sm:$0xff]
  %v300 = vmul.f32 %v279, %v293
  %v301 = vmul.f32 %v296, %v299
  %v302 = vadd.f32 %v300, %v301
  %v303 = vrcp.pop %v298
  %v304 = vmul.f32 %v298, %v303
  %v305 = vsub.f32 2.0, %v304
  %v306 = vmul.f32 %v303, %v305
  %v307 = vmul.f32 %v302, %v306
  %308 = vst.msk [vmem:[#allocation3 + $0x8] sm:$0xff] %vm124, %v307
  %v309 = vld [vmem:[#allocation2 + $0x10] sm:$0xff]
  %v310 = vld [vmem:[#allocation2 + $0x20] sm:$0xff]
  %v311 = vmul.f32 %v309, %v310
  %v312 = vsel %vm124, %v311, 0.0
  %v313 = vrot.slane %v312, 4
  %v314 = vadd.f32 %v312, %v313
  %v315 = vrot.slane %v314, 2
  %v316 = vadd.f32 %v314, %v315
  %v317 = vrot.slane %v316, 1
  %v318 = vadd.f32 %v316, %v317
  %v319 = vmul.f32 %v318, 0.35355338
  %v320 = vld [vmem:[#allocation2 + $0x40] sm:$0xff]
  %v321 = vld [vmem:[#allocation2 + $0x28] sm:$0xff]
  %v322 = vmul.f32 %v309, %v321
  %v323 = vsel %vm124, %v322, 0.0
  %v324 = vrot.slane %v323, 4
  %v325 = vadd.f32 %v323, %v324
  %v326 = vrot.slane %v325, 2
  %v327 = vadd.f32 %v325, %v326
  %v328 = vrot.slane %v327, 1
  %v329 = vadd.f32 %v327, %v328
  %v330 = vmul.f32 %v329, 0.35355338
  %v331 = vmax.f32 %v319, %v330
  %v332 = vsub.f32 %v319, %v331
  %v333 = vmul.f32 %v332, 1.442695
  %v334 = vpow.pop %v333
  %v335 = vsub.f32 %v330, %v331
  %v336 = vmul.f32 %v335, 1.442695
  %v337 = vpow.pop %v336
  %v338 = vadd.f32 %v334, %v337
  %v339 = vld [vmem:[#allocation2 + $0x48] sm:$0xff]
  %v340 = vmul.f32 %v320, %v334
  %v341 = vmul.f32 %v337, %v339
  %v342 = vadd.f32 %v340, %v341
  %v343 = vld [vmem:[#allocation2 + $0x30] sm:$0xff]
  %v344 = vmul.f32 %v309, %v343
  %v345 = vsel %vm124, %v344, 0.0
  %v346 = vrot.slane %v345, 4
  %v347 = vadd.f32 %v345, %v346
  %v348 = vrot.slane %v347, 2
  %v349 = vadd.f32 %v347, %v348
  %v350 = vrot.slane %v349, 1
  %v351 = vadd.f32 %v349, %v350
  %v352 = vmul.f32 %v351, 0.35355338
  %v353 = vmax.f32 %v331, %v352
  %v354 = vsub.f32 %v331, %v353
  %v355 = vmul.f32 %v354, 1.442695
  %v356 = vpow.pop %v355
  %v357 = vsub.f32 %v352, %v353
  %v358 = vmul.f32 %v357, 1.442695
  %v359 = vpow.pop %v358
  %v360 = vmul.f32 %v338, %v356
  %v361 = vadd.f32 %v360, %v359
  %v362 = vld [vmem:[#allocation2 + $0x50] sm:$0xff]
  %v363 = vmul.f32 %v342, %v356
  %v364 = vmul.f32 %v359, %v362
  %v365 = vadd.f32 %v363, %v364
  %v366 = vld [vmem:[#allocation2 + $0x38] sm:$0xff]
  %v367 = vmul.f32 %v309, %v366
  %v368 = vsel %vm124, %v367, 0.0
  %v369 = vrot.slane %v368, 4
  %v370 = vadd.f32 %v368, %v369
  %v371 = vrot.slane %v370, 2
  %v372 = vadd.f32 %v370, %v371
  %v373 = vrot.slane %v372, 1
  %v374 = vadd.f32 %v372, %v373
  %v375 = vmul.f32 %v374, 0.35355338
  %v376 = vmax.f32 %v353, %v375
  %v377 = vsub.f32 %v353, %v376
  %v378 = vmul.f32 %v377, 1.442695
  %v379 = vpow.pop %v378
  %v380 = vsub.f32 %v375, %v376
  %v381 = vmul.f32 %v380, 1.442695
  %v382 = vpow.pop %v381
  %v383 = vmul.f32 %v361, %v379
  %v384 = vadd.f32 %v383, %v382
  %v385 = vld [vmem:[#allocation2 + $0x58] sm:$0xff]
  %v386 = vmul.f32 %v365, %v379
  %v387 = vmul.f32 %v382, %v385
  %v388 = vadd.f32 %v386, %v387
  %v389 = vrcp.pop %v384
  %v390 = vmul.f32 %v384, %v389
  %v391 = vsub.f32 2.0, %v390
  %v392 = vmul.f32 %v389, %v391
  %v393 = vmul.f32 %v388, %v392
  %394 = vst.msk [vmem:[#allocation3 + $0x10] sm:$0xff] %vm124, %v393
  %v395 = vld [vmem:[#allocation2 + $0x18] sm:$0xff]
  %v396 = vld [vmem:[#allocation2 + $0x20] sm:$0xff]
  %v397 = vmul.f32 %v395, %v396
  %v398 = vsel %vm124, %v397, 0.0
  %v399 = vrot.slane %v398, 4
  %v400 = vadd.f32 %v398, %v399
  %v401 = vrot.slane %v400, 2
  %v402 = vadd.f32 %v400, %v401
  %v403 = vrot.slane %v402, 1
  %v404 = vadd.f32 %v402, %v403
  %v405 = vmul.f32 %v404, 0.35355338
  %v406 = vld [vmem:[#allocation2 + $0x40] sm:$0xff]
  %v407 = vld [vmem:[#allocation2 + $0x28] sm:$0xff]
  %v408 = vmul.f32 %v395, %v407
  %v409 = vsel %vm124, %v408, 0.0
  %v410 = vrot.slane %v409, 4
  %v411 = vadd.f32 %v409, %v410
  %v412 = vrot.slane %v411, 2
  %v413 = vadd.f32 %v411, %v412
  %v414 = vrot.slane %v413, 1
  %v415 = vadd.f32 %v413, %v414
  %v416 = vmul.f32 %v415, 0.35355338
  %v417 = vmax.f32 %v405, %v416
  %v418 = vsub.f32 %v405, %v417
  %v419 = vmul.f32 %v418, 1.442695
  %v420 = vpow.pop %v419
  %v421 = vsub.f32 %v416, %v417
  %v422 = vmul.f32 %v421, 1.442695
  %v423 = vpow.pop %v422
  %v424 = vadd.f32 %v420, %v423
  %v425 = vld [vmem:[#allocation2 + $0x48] sm:$0xff]
  %v426 = vmul.f32 %v406, %v420
  %v427 = vmul.f32 %v423, %v425
  %v428 = vadd.f32 %v426, %v427
  %v429 = vld [vmem:[#allocation2 + $0x30] sm:$0xff]
  %v430 = vmul.f32 %v395, %v429
  %v431 = vsel %vm124, %v430, 0.0
  %v432 = vrot.slane %v431, 4
  %v433 = vadd.f32 %v431, %v432
  %v434 = vrot.slane %v433, 2
  %v435 = vadd.f32 %v433, %v434
  %v436 = vrot.slane %v435, 1
  %v437 = vadd.f32 %v435, %v436
  %v438 = vmul.f32 %v437, 0.35355338
  %v439 = vmax.f32 %v417, %v438
  %v440 = vsub.f32 %v417, %v439
  %v441 = vmul.f32 %v440, 1.442695
  %v442 = vpow.pop %v441
  %v443 = vsub.f32 %v438, %v439
  %v444 = vmul.f32 %v443, 1.442695
  %v445 = vpow.pop %v444
  %v446 = vmul.f32 %v424, %v442
  %v447 = vadd.f32 %v446, %v445
  %v448 = vld [vmem:[#allocation2 + $0x50] sm:$0xff]
  %v449 = vmul.f32 %v428, %v442
  %v450 = vmul.f32 %v445, %v448
  %v451 = vadd.f32 %v449, %v450
  %v452 = vld [vmem:[#allocation2 + $0x38] sm:$0xff]
  %v453 = vmul.f32 %v395, %v452
  %v454 = vsel %vm124, %v453, 0.0
  %v455 = vrot.slane %v454, 4
  %v456 = vadd.f32 %v454, %v455
  %v457 = vrot.slane %v456, 2
  %v458 = vadd.f32 %v456, %v457
  %v459 = vrot.slane %v458, 1
  %v460 = vadd.f32 %v458, %v459
  %v461 = vmul.f32 %v460, 0.35355338
  %v462 = vmax.f32 %v439, %v461
  %v463 = vsub.f32 %v439, %v462
  %v464 = vmul.f32 %v463, 1.442695
  %v465 = vpow.pop %v464
  %v466 = vsub.f32 %v461, %v462
  %v467 = vmul.f32 %v466, 1.442695
  %v468 = vpow.pop %v467
  %v469 = vmul.f32 %v447, %v465
  %v470 = vadd.f32 %v469, %v468
  %v471 = vld [vmem:[#allocation2 + $0x58] sm:$0xff]
  %v472 = vmul.f32 %v451, %v465
  %v473 = vmul.f32 %v468, %v471
  %v474 = vadd.f32 %v472, %v473
  %v475 = vrcp.pop %v470
  %v476 = vmul.f32 %v470, %v475
  %v477 = vsub.f32 2.0, %v476
  %v478 = vmul.f32 %v475, %v477
  %v479 = vmul.f32 %v474, %v478
  %480 = vst.msk [vmem:[#allocation3 + $0x18] sm:$0xff] %vm124, %v479
  %v481 = vld [vmem:[%s2] sm:$0xff]
  %v482 = vld [vmem:[%s2 + $0x8] sm:$0xff]
  %v483 = vld [vmem:[%s2 + $0x10] sm:$0xff]
  %v484 = vld [vmem:[%s2 + $0x18] sm:$0xff]
  %v485 = vld [vmem:[#allocation3] sm:$0xff]
  %v486 = vld [vmem:[#allocation3 + $0x8] sm:$0xff]
  %v487 = vld [vmem:[#allocation3 + $0x10] sm:$0xff]
  %v488 = vld [vmem:[#allocation3 + $0x18] sm:$0xff]
  %v490 = vsel %vm28, %v481, 0
  %v493 = vsel %vm28, %v482, 0
  %v496 = vsel %vm28, %v483, 0
  %v499 = vsel %vm28, %v484, 0
  %501 = vmatpush.msra.mxu0 0.0
  %502 = vmatpush.msra.mxu0 0.0
  %503 = vmatpush.msra.mxu0 0.0
  %504 = vmatpush.msra.mxu0 0.0
  %505 = vmatpush.msra.mxu0 0.0
  %506 = vmatpush.msra.mxu0 0.0
  %507 = vmatpush.msra.mxu0 0.0
  %508 = vmatpush.msra.mxu0 0.0
  %509 = vmatpush.msra.mxu0 0.0
  %510 = vmatpush.msra.mxu0 0.0
  %511 = vmatpush.msra.mxu0 0.0
  %512 = vmatpush.msra.mxu0 0.0
  %513 = vmatpush.msra.mxu0 %v488
  %514 = vmatpush.msra.mxu0 %v487
  %515 = vmatpush.msra.mxu0 %v486
  %516 = vmatpush.msra.mxu0 %v485
  %517 = vmatmul.f32.gmra.mxu0 %v490
  %v518 = vpop.f32.mrf.mxu0
  %v519 = vadd.f32 0.0, %v518
  %520 = vmatmul.f32.gmra.mxu0 %v493
  %v521 = vpop.f32.mrf.mxu0
  %v522 = vadd.f32 0.0, %v521
  %523 = vmatmul.f32.gmra.mxu0 %v496
  %v524 = vpop.f32.mrf.mxu0
  %v525 = vadd.f32 0.0, %v524
  %526 = vmatmul.f32.gmra.mxu0 %v499
  %v527 = vpop.f32.mrf.mxu0
  %v528 = vadd.f32 0.0, %v527
  %529 = vdwg.mxu0
  %530 = vst.msk [vmem:[%s3] sm:$0xff] %vm124, %v519
  %531 = vst.msk [vmem:[%s3 + $0x8] sm:$0xff] %vm124, %v522
  %532 = vst.msk [vmem:[%s3 + $0x10] sm:$0xff] %vm124, %v525
  %533 = vst.msk [vmem:[%s3 + $0x18] sm:$0xff] %vm124, %v528
  // Predicated region
  $region14: #{tpu_custom_call.1} parent=0 // pred_check
    _
  $region15: #{tpu_custom_call.1} parent=0 // pred_check_branch
    %535 = sbr.rel (0) target = $region17
  $region16: #{tpu_custom_call.1} parent=0 // pred_region
    _
  $region17: #{tpu_custom_call.1} parent=0 // pred_fallthru
    _
  // Predicated region
  $region18: #{tpu_custom_call.1} parent=0 // pred_check
    _
  $region19: #{tpu_custom_call.1} parent=0 // pred_check_branch
    %537 = sbr.rel (0) target = $region21
  $region20: #{tpu_custom_call.1} parent=0 // pred_region
    _
  $region21: #{tpu_custom_call.1} parent=0 // pred_fallthru
    _

</llo_original>
